<compile_context>
chip_gen: v7x
topology: tpu7x:2x2x1
jax: 0.10.0
libtpu: 0.0.40
codegen_flags: <defaults>
</compile_context>

<pallas_src>
import jax
import jax.numpy as jnp
from jax.experimental import pallas as pl
from jax.experimental.pallas import tpu as pltpu

STUDENT_TEMP = 0.1
TEACHER_TEMP = 0.07
REG_WEIGHT = 0.05

_HARD_CAP_ROWS = 1024  # 512-1024 row tiles are near the HBM roofline on all gens


def _round_up(x, m):
    return ((x + m - 1) // m) * m


def _detect_vmem_capacity_bytes():
    try:
        cap = int(pltpu.get_tpu_info().vmem_capacity_bytes)
        if cap > 0:
            return cap
    except Exception:
        pass
    return 64 << 20  # conservative fallback (smallest known per-TC VMEM)


def _detect_num_tensorcores():
    """2 on v7x (2 TC/chip), else 1.  Conservative: defaults to 1."""
    try:
        kind = str(jax.devices()[0].device_kind).lower()
        if "v7" in kind:
            return 2
    except Exception:
        pass
    return 1


def _make_dino_kernel(steps_per_core, block_b, true_b, padded_b):
    needs_mask = padded_b > true_b

    def kernel(student_ref, teacher_ref, center_ref, s_reg_ref, t_reg_ref,
               ce_out_ref, sq_out_ref, ce_acc, sq_acc):
        c = pl.program_id(0)
        j = pl.program_id(1)

        @pl.when(j == 0)
        def _zero():
            ce_acc[...] = jnp.zeros_like(ce_acc)
            sq_acc[...] = jnp.zeros_like(sq_acc)

        # ---- DINO cross-entropy term (tile partial sum) ----
        s = student_ref[...].astype(jnp.float32) * (1.0 / STUDENT_TEMP)            # (TB, D)
        t = (teacher_ref[...].astype(jnp.float32)
             - center_ref[...].astype(jnp.float32)) * (1.0 / TEACHER_TEMP)         # (TB, D)

        s_max = jnp.max(s, axis=-1, keepdims=True)
        s_shift = s - s_max
        s_lse = jnp.log(jnp.sum(jnp.exp(s_shift), axis=-1, keepdims=True))         # (TB, 1)

        t_max = jnp.max(t, axis=-1, keepdims=True)
        t_exp = jnp.exp(t - t_max)                                                  # (TB, D)
        t_norm = jnp.sum(t_exp, axis=-1, keepdims=True)                             # (TB, 1)
        weighted = jnp.sum(t_exp * s_shift, axis=-1, keepdims=True)                 # (TB, 1)

        # -sum_d softmax(t) * log_softmax(s) per row (per-row scalar division only).
        ce_rows = s_lse - weighted / t_norm                                         # (TB, 1)

        if needs_mask:
            row0 = (c * steps_per_core + j) * block_b
            rows = row0 + jax.lax.broadcasted_iota(jnp.int32, (block_b, 1), 0)
            ce_rows = jnp.where(rows < true_b, ce_rows, 0.0)

        ce_acc[...] += jnp.sum(ce_rows, keepdims=True)                               # (1, 1)

        # ---- register consistency term (padded rows are zeros -> contribute 0) ----
        diff = s_reg_ref[...].astype(jnp.float32) - t_reg_ref[...].astype(jnp.float32)
        sq_acc[...] += jnp.sum(diff * diff, keepdims=True)                           # (1, 1)

        # Lane-dense write-back, once per core slice.
        @pl.when(j == steps_per_core - 1)
        def _write():
            ce_out_ref[...] = jnp.broadcast_to(ce_acc[...].reshape(1, 1, 1),
                                               ce_out_ref.shape)
            sq_out_ref[...] = jnp.broadcast_to(sq_acc[...].reshape(1, 1, 1),
                                               sq_out_ref.shape)

    return kernel


def dino_loss(student_output, teacher_output, center, s_reg, t_reg,
              *, block_b=None, num_cores=None, interpret=False):
    """Pallas implementation of DINOLoss.forward. Returns a scalar f32."""
    B, D = student_output.shape
    assert teacher_output.shape == (B, D)
    center = jnp.asarray(center).reshape(1, D)

    # Flatten register tokens to lane-dense (B, N*Dr).
    s_reg2 = s_reg.reshape(B, -1)
    t_reg2 = t_reg.reshape(B, -1)
    n_reg = s_reg2.shape[1]
    reg_count = B * n_reg

    def _isz(a):
        return jnp.dtype(a.dtype).itemsize

    # Sublane alignment for the batch-tiled blocks: 8 (f32) / 16 (bf16) / 32 (int8).
    min_isz = min(_isz(student_output), _isz(teacher_output), _isz(s_reg2), _isz(t_reg2))
    row_align = {4: 8, 2: 16, 1: 32}.get(min_isz, 8)

    # ---- VMEM budgeting: streamed double-buffered tiles + f32 intermediates ----
    vmem_cap = _detect_vmem_capacity_bytes()
    vmem_limit = int(min(96 << 20, (vmem_cap * 3) // 4))

    stream_row = (D * (_isz(student_output) + _isz(teacher_output))
                  + n_reg * (_isz(s_reg2) + _isz(t_reg2)))
    interm_row = 6 * D * 4 + 3 * n_reg * 4        # s, t, s_shift, t_exp, products + reg f32
    per_row = 2 * stream_row + interm_row         # x2: double-buffered input tiles

    if num_cores is None:
        num_cores = _detect_num_tensorcores()
    num_cores = max(1, int(num_cores))

    if block_b is None:
        budget = vmem_limit // 2                  # headroom for compiler scratch / center / outs
        cap_rows = max(row_align, (budget // max(per_row, 1)) // row_align * row_align)
        per_core_rows = _round_up(-(-B // num_cores), row_align)   # ceil(B/cores), aligned
        block_b = max(row_align, min(cap_rows, per_core_rows, _HARD_CAP_ROWS))
    assert block_b % row_align == 0, (
        f"block_b={block_b} must be a multiple of {row_align} for these dtypes")

    padded_b = _round_up(B, block_b * num_cores)
    steps_per_core = padded_b // (block_b * num_cores)

    if padded_b > B:
        pad = padded_b - B
        _pad = lambda x: jnp.pad(x, ((0, pad), (0, 0)))
        student_output = _pad(student_output)
        teacher_output = _pad(teacher_output)
        s_reg2 = _pad(s_reg2)
        t_reg2 = _pad(t_reg2)

    batch_idx = lambda c, j: (c * steps_per_core + j, 0)
    kernel = _make_dino_kernel(steps_per_core, block_b, B, padded_b)

    if num_cores > 1:
        dim_sem = (pltpu.CORE_PARALLEL, pltpu.ARBITRARY)   # real 2-TC split on v7x
    else:
        dim_sem = ("arbitrary", "arbitrary")               # size-1 leading axis, no split

    total_bytes = int(
        student_output.size * _isz(student_output)
        + teacher_output.size * _isz(teacher_output)
        + center.size * 4
        + s_reg2.size * _isz(s_reg2)
        + t_reg2.size * _isz(t_reg2)
        + 2 * num_cores * 128 * 4)

    # NOTE: if DMA is still exposed at large block_b, pipeline_mode=pl.Buffered(3)
    # on the (small) register BlockSpecs is the next knob to try.
    ce_out, sq_out = pl.pallas_call(
        kernel,
        out_shape=(
            jax.ShapeDtypeStruct((num_cores, 1, 128), jnp.float32),
            jax.ShapeDtypeStruct((num_cores, 1, 128), jnp.float32),
        ),
        grid_spec=pltpu.PrefetchScalarGridSpec(
            num_scalar_prefetch=0,
            grid=(num_cores, steps_per_core),
            in_specs=[
                pl.BlockSpec((block_b, D), batch_idx),          # student tile
                pl.BlockSpec((block_b, D), batch_idx),          # teacher tile
                pl.BlockSpec((1, D), lambda c, j: (0, 0)),      # center: VMEM-resident
                pl.BlockSpec((block_b, n_reg), batch_idx),      # s_reg tile
                pl.BlockSpec((block_b, n_reg), batch_idx),      # t_reg tile
            ],
            out_specs=[
                pl.BlockSpec((1, 1, 128), lambda c, j: (c, 0, 0)),
                pl.BlockSpec((1, 1, 128), lambda c, j: (c, 0, 0)),
            ],
            scratch_shapes=[
                pltpu.VMEM((1, 1), jnp.float32),    # CE accumulator (per-core)
                pltpu.VMEM((1, 1), jnp.float32),    # squared-diff accumulator (per-core)
            ],
        ),
        compiler_params=pltpu.CompilerParams(
            dimension_semantics=dim_sem,
            vmem_limit_bytes=vmem_limit),
        cost_estimate=pl.CostEstimate(
            flops=int(8 * padded_b * D + 3 * padded_b * n_reg),
            transcendentals=int(2 * padded_b * D + 2 * padded_b),
            bytes_accessed=total_bytes),
        interpret=interpret,
    )(student_output, teacher_output, center, s_reg2, t_reg2)

    # Global normalization (true B, true element count) in the wrapper.
    ce = jnp.sum(ce_out[:, 0, 0]) / B
    mse = jnp.sum(sq_out[:, 0, 0]) / reg_count
    return ce + REG_WEIGHT * mse


def dino_loss_ref(student_output, teacher_output, center, s_reg, t_reg):
    """Pure-JAX reference mirroring the PyTorch module."""
    s = student_output.astype(jnp.float32) / STUDENT_TEMP
    t = (teacher_output.astype(jnp.float32) - center.astype(jnp.float32)) / TEACHER_TEMP
    s_logp = jax.nn.log_softmax(s, axis=-1)
    t_probs = jax.nn.softmax(t, axis=-1)
    loss = -jnp.mean(jnp.sum(t_probs * s_logp, axis=-1))
    reg = jnp.mean((s_reg.astype(jnp.float32) - t_reg.astype(jnp.float32)) ** 2)
    return loss + REG_WEIGHT * reg


if __name__ == "__main__":
    # Small shapes consistent with the module's forward contract.
    B, D = 32, 256       # student/teacher projections (output_dim scaled down)
    N, DR = 4, 128       # register tokens

    key = jax.random.PRNGKey(0)
    k1, k2, k3, k4, k5 = jax.random.split(key, 5)
    student = jax.random.normal(k1, (B, D), dtype=jnp.float32)
    teacher = jax.random.normal(k2, (B, D), dtype=jnp.float32)
    center = 0.01 * jax.random.normal(k3, (1, D), dtype=jnp.float32)
    s_reg = jax.random.normal(k4, (B, N, DR), dtype=jnp.float32)
    t_reg = jax.random.normal(k5, (B, N, DR), dtype=jnp.float32)

    ref = dino_loss_ref(student, teacher, center, s_reg, t_reg)

    # 1) Auto tile sizing (degenerates to a single tile at these small shapes).
    out_auto = jax.block_until_ready(dino_loss(student, teacher, center, s_reg, t_reg))
    assert jnp.allclose(out_auto, ref, rtol=1e-4, atol=1e-5), (out_auto, ref)

    # 2) Forced multi-step accumulation path (grid = (1, 4)).
    out_tiled = jax.block_until_ready(
        dino_loss(student, teacher, center, s_reg, t_reg, block_b=8))
    assert jnp.allclose(out_tiled, ref, rtol=1e-4, atol=1e-5), (out_tiled, ref)

    # 3) Ragged batch exercising the pad + in-kernel mask path (B=30 -> padded 32).
    Br = 30
    ref_r = dino_loss_ref(student[:Br], teacher[:Br], center, s_reg[:Br], t_reg[:Br])
    out_r = jax.block_until_ready(
        dino_loss(student[:Br], teacher[:Br], center, s_reg[:Br], t_reg[:Br]))
    assert jnp.allclose(out_r, ref_r, rtol=1e-4, atol=1e-5), (out_r, ref_r)

    # 4) bf16 inputs (halved HBM traffic); kernel casts + accumulates in f32.
    student_bf = student.astype(jnp.bfloat16)
    teacher_bf = teacher.astype(jnp.bfloat16)
    s_reg_bf = s_reg.astype(jnp.bfloat16)
    t_reg_bf = t_reg.astype(jnp.bfloat16)
    ref_bf = dino_loss_ref(student_bf, teacher_bf, center, s_reg_bf, t_reg_bf)
    out_bf = jax.block_until_ready(
        dino_loss(student_bf, teacher_bf, center, s_reg_bf, t_reg_bf, block_b=16))
    assert jnp.allclose(out_bf, ref_bf, rtol=1e-3, atol=1e-4), (out_bf, ref_bf)

    print("KERNEL_OK")
</pallas_src>

<mosaic_0001>
module attributes {stable_mosaic.version = 11 : i64} {
  func.func @kernel(%arg0: i32, %arg1: i32, %arg2: memref<32x256xf32, #tpu.memory_space<vmem>>, %arg3: memref<32x256xf32, #tpu.memory_space<vmem>>, %arg4: memref<1x256xf32, #tpu.memory_space<vmem>>, %arg5: memref<32x512xf32, #tpu.memory_space<vmem>>, %arg6: memref<32x512xf32, #tpu.memory_space<vmem>>, %arg7: memref<1x1x128xf32, #tpu.memory_space<vmem>>, %arg8: memref<1x1x128xf32, #tpu.memory_space<vmem>>, %arg9: memref<1x1xf32, #tpu.memory_space<vmem>>, %arg10: memref<1x1xf32, #tpu.memory_space<vmem>>) attributes {dimension_semantics = [#tpu.dimension_semantics<arbitrary>, #tpu.dimension_semantics<arbitrary>], iteration_bounds = array<i64: 1, 1>, scalar_prefetch = 0 : i64, scratch_operands = 2 : i64, tpu.core_type = #tpu.core_type<tc>, window_params = [{transform_indices = @transform_0, window_bounds = array<i64: 32, 256>}, {transform_indices = @transform_1, window_bounds = array<i64: 32, 256>}, {pipeline_mode = #tpu.pipeline_mode<synchronous>, transform_indices = @transform_2, window_bounds = array<i64: 1, 256>}, {transform_indices = @transform_3, window_bounds = array<i64: 32, 512>}, {transform_indices = @transform_4, window_bounds = array<i64: 32, 512>}, {transform_indices = @transform_5, window_bounds = array<i64: 1, 1, 128>}, {transform_indices = @transform_6, window_bounds = array<i64: 1, 1, 128>}]} {
    %c0_i32 = arith.constant 0 : i32
    %0 = arith.cmpi eq, %arg1, %c0_i32 : i32
    %1 = arith.extui %0 : i1 to i32
    %c0_i32_0 = arith.constant 0 : i32
    %2 = arith.cmpi ne, %1, %c0_i32_0 : i32
    scf.if %2 {
      %cst_28 = arith.constant 0.000000e+00 : f32
      %55 = vector.broadcast %cst_28 : f32 to vector<1x1xf32>
      %c0_29 = arith.constant 0 : index
      %c0_30 = arith.constant 0 : index
      %56 = vector.load %arg9[%c0_29, %c0_30] : memref<1x1xf32, #tpu.memory_space<vmem>>, vector<1x1xf32>
      tpu.vector_store %arg9[%c0_29, %c0_30], %55 {strides = array<i32>} : memref<1x1xf32, #tpu.memory_space<vmem>>, vector<1x1xf32>,
      %cst_31 = arith.constant 0.000000e+00 : f32
      %57 = vector.broadcast %cst_31 : f32 to vector<1x1xf32>
      %c0_32 = arith.constant 0 : index
      %c0_33 = arith.constant 0 : index
      %58 = vector.load %arg10[%c0_32, %c0_33] : memref<1x1xf32, #tpu.memory_space<vmem>>, vector<1x1xf32>
      tpu.vector_store %arg10[%c0_32, %c0_33], %57 {strides = array<i32>} : memref<1x1xf32, #tpu.memory_space<vmem>>, vector<1x1xf32>,
    } else {
    }
    %c0 = arith.constant 0 : index
    %c0_1 = arith.constant 0 : index
    %3 = vector.load %arg2[%c0, %c0_1] : memref<32x256xf32, #tpu.memory_space<vmem>>, vector<32x256xf32>
    %cst = arith.constant 1.000000e+01 : f32
    %4 = vector.broadcast %cst : f32 to vector<32x256xf32>
    %5 = arith.mulf %3, %4 : vector<32x256xf32>
    %c0_2 = arith.constant 0 : index
    %c0_3 = arith.constant 0 : index
    %6 = vector.load %arg3[%c0_2, %c0_3] : memref<32x256xf32, #tpu.memory_space<vmem>>, vector<32x256xf32>
    %c0_4 = arith.constant 0 : index
    %c0_5 = arith.constant 0 : index
    %7 = vector.load %arg4[%c0_4, %c0_5] : memref<1x256xf32, #tpu.memory_space<vmem>>, vector<1x256xf32>
    %8 = vector.broadcast %7 : vector<1x256xf32> to vector<32x256xf32>
    %9 = arith.subf %6, %8 : vector<32x256xf32>
    %cst_6 = arith.constant 14.2857141 : f32
    %10 = vector.broadcast %cst_6 : f32 to vector<32x256xf32>
    %11 = arith.mulf %9, %10 : vector<32x256xf32>
    %cst_7 = arith.constant dense<0xFF800000> : vector<32xf32>
    %12 = vector.multi_reduction <maximumf>, %5, %cst_7 [1] : vector<32x256xf32> to vector<32xf32>
    %13 = vector.shape_cast %12 : vector<32xf32> to vector<32x1xf32>
    %14 = vector.broadcast %13 : vector<32x1xf32> to vector<32x256xf32>
    %15 = arith.subf %5, %14 : vector<32x256xf32>
    %16 = math.exp %15 : vector<32x256xf32>
    %cst_8 = arith.constant dense<0.000000e+00> : vector<32xf32>
    %17 = vector.multi_reduction <add>, %16, %cst_8 [1] : vector<32x256xf32> to vector<32xf32>
    %18 = vector.shape_cast %17 : vector<32xf32> to vector<32x1xf32>
    %19 = math.log %18 : vector<32x1xf32>
    %cst_9 = arith.constant dense<0xFF800000> : vector<32xf32>
    %20 = vector.multi_reduction <maximumf>, %11, %cst_9 [1] : vector<32x256xf32> to vector<32xf32>
    %21 = vector.shape_cast %20 : vector<32xf32> to vector<32x1xf32>
    %22 = vector.broadcast %21 : vector<32x1xf32> to vector<32x256xf32>
    %23 = arith.subf %11, %22 : vector<32x256xf32>
    %24 = math.exp %23 : vector<32x256xf32>
    %cst_10 = arith.constant dense<0.000000e+00> : vector<32xf32>
    %25 = vector.multi_reduction <add>, %24, %cst_10 [1] : vector<32x256xf32> to vector<32xf32>
    %26 = vector.shape_cast %25 : vector<32xf32> to vector<32x1xf32>
    %27 = arith.mulf %24, %15 : vector<32x256xf32>
    %cst_11 = arith.constant dense<0.000000e+00> : vector<32xf32>
    %28 = vector.multi_reduction <add>, %27, %cst_11 [1] : vector<32x256xf32> to vector<32xf32>
    %29 = vector.shape_cast %28 : vector<32xf32> to vector<32x1xf32>
    %30 = arith.divf %29, %26 : vector<32x1xf32>
    %31 = arith.subf %19, %30 : vector<32x1xf32>
    %c0_12 = arith.constant 0 : index
    %c0_13 = arith.constant 0 : index
    %32 = vector.load %arg9[%c0_12, %c0_13] : memref<1x1xf32, #tpu.memory_space<vmem>>, vector<1x1xf32>
    %33 = vector.shape_cast %31 : vector<32x1xf32> to vector<1x32x1xf32>
    %cst_14 = arith.constant dense<0.000000e+00> : vector<1xf32>
    %34 = vector.multi_reduction <add>, %33, %cst_14 [1, 2] : vector<1x32x1xf32> to vector<1xf32>
    %35 = vector.shape_cast %34 : vector<1xf32> to vector<1x1x1xf32>
    %36 = vector.extract %35[0, 0, 0] : f32 from vector<1x1x1xf32>
    %37 = vector.broadcast %36 : f32 to vector<1x1xf32>
    %38 = arith.addf %32, %37 : vector<1x1xf32>
    %c0_15 = arith.constant 0 : index
    %c0_16 = arith.constant 0 : index
    %39 = vector.load %arg9[%c0_15, %c0_16] : memref<1x1xf32, #tpu.memory_space<vmem>>, vector<1x1xf32>
    tpu.vector_store %arg9[%c0_15, %c0_16], %38 {strides = array<i32>} : memref<1x1xf32, #tpu.memory_space<vmem>>, vector<1x1xf32>,
    %c0_17 = arith.constant 0 : index
    %c0_18 = arith.constant 0 : index
    %40 = vector.load %arg5[%c0_17, %c0_18] : memref<32x512xf32, #tpu.memory_space<vmem>>, vector<32x512xf32>
    %c0_19 = arith.constant 0 : index
    %c0_20 = arith.constant 0 : index
    %41 = vector.load %arg6[%c0_19, %c0_20] : memref<32x512xf32, #tpu.memory_space<vmem>>, vector<32x512xf32>
    %42 = arith.subf %40, %41 : vector<32x512xf32>
    %c0_21 = arith.constant 0 : index
    %c0_22 = arith.constant 0 : index
    %43 = vector.load %arg10[%c0_21, %c0_22] : memref<1x1xf32, #tpu.memory_space<vmem>>, vector<1x1xf32>
    %44 = arith.mulf %42, %42 : vector<32x512xf32>
    %45 = vector.shape_cast %44 : vector<32x512xf32> to vector<1x32x512xf32>
    %cst_23 = arith.constant dense<0.000000e+00> : vector<1xf32>
    %46 = vector.multi_reduction <add>, %45, %cst_23 [1, 2] : vector<1x32x512xf32> to vector<1xf32>
    %47 = vector.shape_cast %46 : vector<1xf32> to vector<1x1x1xf32>
    %48 = vector.extract %47[0, 0, 0] : f32 from vector<1x1x1xf32>
    %49 = vector.broadcast %48 : f32 to vector<1x1xf32>
    %50 = arith.addf %43, %49 : vector<1x1xf32>
    %c0_24 = arith.constant 0 : index
    %c0_25 = arith.constant 0 : index
    %51 = vector.load %arg10[%c0_24, %c0_25] : memref<1x1xf32, #tpu.memory_space<vmem>>, vector<1x1xf32>
    tpu.vector_store %arg10[%c0_24, %c0_25], %50 {strides = array<i32>} : memref<1x1xf32, #tpu.memory_space<vmem>>, vector<1x1xf32>,
    %c0_i32_26 = arith.constant 0 : i32
    %52 = arith.cmpi eq, %arg1, %c0_i32_26 : i32
    %53 = arith.extui %52 : i1 to i32
    %c0_i32_27 = arith.constant 0 : i32
    %54 = arith.cmpi ne, %53, %c0_i32_27 : i32
    scf.if %54 {
      %c0_28 = arith.constant 0 : index
      %c0_29 = arith.constant 0 : index
      %55 = vector.load %arg9[%c0_28, %c0_29] : memref<1x1xf32, #tpu.memory_space<vmem>>, vector<1x1xf32>
      %56 = vector.shape_cast %55 : vector<1x1xf32> to vector<1x1x1xf32>
      %57 = vector.shape_cast %56 : vector<1x1x1xf32> to vector<1x1x1xf32>
      %58 = vector.broadcast %57 : vector<1x1x1xf32> to vector<1x1x128xf32>
      %c0_30 = arith.constant 0 : index
      %c0_31 = arith.constant 0 : index
      %c0_32 = arith.constant 0 : index
      %59 = vector.load %arg7[%c0_30, %c0_31, %c0_32] : memref<1x1x128xf32, #tpu.memory_space<vmem>>, vector<1x1x128xf32>
      tpu.vector_store %arg7[%c0_30, %c0_31, %c0_32], %58 {strides = array<i32>} : memref<1x1x128xf32, #tpu.memory_space<vmem>>, vector<1x1x128xf32>,
      %c0_33 = arith.constant 0 : index
      %c0_34 = arith.constant 0 : index
      %60 = vector.load %arg10[%c0_33, %c0_34] : memref<1x1xf32, #tpu.memory_space<vmem>>, vector<1x1xf32>
      %61 = vector.shape_cast %60 : vector<1x1xf32> to vector<1x1x1xf32>
      %62 = vector.shape_cast %61 : vector<1x1x1xf32> to vector<1x1x1xf32>
      %63 = vector.broadcast %62 : vector<1x1x1xf32> to vector<1x1x128xf32>
      %c0_35 = arith.constant 0 : index
      %c0_36 = arith.constant 0 : index
      %c0_37 = arith.constant 0 : index
      %64 = vector.load %arg8[%c0_35, %c0_36, %c0_37] : memref<1x1x128xf32, #tpu.memory_space<vmem>>, vector<1x1x128xf32>
      tpu.vector_store %arg8[%c0_35, %c0_36, %c0_37], %63 {strides = array<i32>} : memref<1x1x128xf32, #tpu.memory_space<vmem>>, vector<1x1x128xf32>,
    } else {
    }
    return
  }
  func.func @transform_0(%arg0: i32, %arg1: i32) -> (i32, i32) {
    %c1_i32 = arith.constant 1 : i32
    %0 = arith.muli %arg0, %c1_i32 : i32
    %1 = arith.addi %0, %arg1 : i32
    %c0_i32 = arith.constant 0 : i32
    %c0_i32_0 = arith.constant 0 : i32
    return %1, %c0_i32 : i32, i32
  }
  func.func @transform_1(%arg0: i32, %arg1: i32) -> (i32, i32) {
    %c1_i32 = arith.constant 1 : i32
    %0 = arith.muli %arg0, %c1_i32 : i32
    %1 = arith.addi %0, %arg1 : i32
    %c0_i32 = arith.constant 0 : i32
    %c0_i32_0 = arith.constant 0 : i32
    return %1, %c0_i32 : i32, i32
  }
  func.func @transform_2(%arg0: i32, %arg1: i32) -> (i32, i32) {
    %c0_i32 = arith.constant 0 : i32
    %c0_i32_0 = arith.constant 0 : i32
    %c0_i32_1 = arith.constant 0 : i32
    return %c0_i32, %c0_i32_0 : i32, i32
  }
  func.func @transform_3(%arg0: i32, %arg1: i32) -> (i32, i32) {
    %c1_i32 = arith.constant 1 : i32
    %0 = arith.muli %arg0, %c1_i32 : i32
    %1 = arith.addi %0, %arg1 : i32
    %c0_i32 = arith.constant 0 : i32
    %c0_i32_0 = arith.constant 0 : i32
    return %1, %c0_i32 : i32, i32
  }
  func.func @transform_4(%arg0: i32, %arg1: i32) -> (i32, i32) {
    %c1_i32 = arith.constant 1 : i32
    %0 = arith.muli %arg0, %c1_i32 : i32
    %1 = arith.addi %0, %arg1 : i32
    %c0_i32 = arith.constant 0 : i32
    %c0_i32_0 = arith.constant 0 : i32
    return %1, %c0_i32 : i32, i32
  }
  func.func @transform_5(%arg0: i32, %arg1: i32) -> (i32, i32, i32) {
    %c0_i32 = arith.constant 0 : i32
    %c0_i32_0 = arith.constant 0 : i32
    %c0_i32_1 = arith.constant 0 : i32
    return %arg0, %c0_i32, %c0_i32_0 : i32, i32, i32
  }
  func.func @transform_6(%arg0: i32, %arg1: i32) -> (i32, i32, i32) {
    %c0_i32 = arith.constant 0 : i32
    %c0_i32_0 = arith.constant 0 : i32
    %c0_i32_1 = arith.constant 0 : i32
    return %arg0, %c0_i32, %c0_i32_0 : i32, i32, i32
  }
}

</mosaic_0001>

<llo_original>
// kernel: tpu_custom_call.1
$region0: #{tpu_custom_call.1}
  #allocation0 [shape = 'u32[]', space=smem, size = 0x4, offset = 0x4, fixed_abs, tag = 'smem constant byte address 0x4 - core index']
  #allocation1 [shape = 'u32[144,128]{1,0:T(1,128)}', space=vmem, size = 0x12000, scoped, tag = 'internal scratch']
  #allocation2 [shape = 'f32[1,1]{1,0:T(1,128)}', space=vmem, size = 0x200, scoped, tag = 'scratch operand']
  #allocation3 [shape = 'f32[1,1]{1,0:T(1,128)}', space=vmem, size = 0x200, scoped, tag = 'scratch operand']
  %s0 = inlined_call_operand.hbm [shape: f32[32,256], index: 0, kind: input, shape index: {}]
  %s1 = inlined_call_operand.hbm [shape: f32[32,256], index: 1, kind: input, shape index: {}]
  %s2 = inlined_call_operand.vmem [shape: f32[1,256], index: 2, kind: input, shape index: {}]
  %s3 = inlined_call_operand.hbm [shape: f32[32,512], index: 3, kind: input, shape index: {}]
  %s4 = inlined_call_operand.hbm [shape: f32[32,512], index: 4, kind: input, shape index: {}]
  %s5 = inlined_call_operand.hbm [shape: f32[1,1,128], index: 5, kind: output, shape index: {0}]
  %s6 = inlined_call_operand.hbm [shape: f32[1,1,128], index: 6, kind: output, shape index: {1}]
  %7 = xla_tuple %s5, %s6
  %s8 = sld [smem:[#allocation0]]
  $region62: #{tpu_custom_call.1} parent=0
    _
  %s10 = ssub.s32 1, %s8
  %s11 = scalar_select 0, %s10, %s8
  $region1: #{tpu_custom_call.1} parent=0
    #allocation4 [shape = 'u8[32768]{0}', space=vmem, size = 0x8000, scoped, tag = 'input window, operand 0, single buffered']
    #allocation5 [shape = 's32[1]{0}', space=sflag, size = 0x4, scoped, tag = 'scoped memory for tpu_custom_call.1']
    #allocation6 [shape = 's32[1]{0}', space=sflag, size = 0x4, scoped, tag = 'scoped memory for tpu_custom_call.1']
    #allocation7 [shape = 'u8[32768]{0}', space=vmem, size = 0x8000, scoped, tag = 'input window, operand 1, single buffered']
    #allocation8 [shape = 's32[1]{0}', space=sflag, size = 0x4, scoped, tag = 'scoped memory for tpu_custom_call.1']
    #allocation9 [shape = 'u8[65536]{0}', space=vmem, size = 0x10000, scoped, tag = 'input window, operand 3, single buffered']
    #allocation10 [shape = 'u8[65536]{0}', space=vmem, size = 0x10000, scoped, tag = 'input window, operand 4, single buffered']
    #allocation11 [shape = 's32[1]{0}', space=sflag, size = 0x4, scoped, tag = 'scoped memory for tpu_custom_call.1']
    #allocation12 [shape = 'u8[512]{0}', space=vmem, size = 0x400, scoped, tag = 'output window, operand 0, single buffered']
    #allocation13 [shape = 'u8[512]{0}', space=vmem, size = 0x400, scoped, tag = 'output window, operand 1, single buffered']
    #allocation14 [shape = 's32[1]{0}', space=sflag, size = 0x4, scoped, tag = 'scoped memory for tpu_custom_call.1']
    %12 = vsyncpa [#allocation5], 0
    %13 = vsyncpa [#allocation8], 0
    %14 = vsyncpa [#allocation11], 0
    %15 = vsyncpa [#allocation6], 0
    %16 = vsyncpa [#allocation14], 0
    // Predicated region
    $region2: #{tpu_custom_call.1} parent=1 // pred_check
      _
    $region3: #{tpu_custom_call.1} parent=1 // pred_check_branch
      %18 = sbr.rel (0) target = $region5
    $region4: #{tpu_custom_call.1} parent=1 // pred_region
      %s19 = sadd.s32 0, 0
      %s20 = smul.u32 4, %s19
      %s22 = ssub.s32 1024, 1024
      %23 = vsyncadd [#allocation5], %s22
      %s24 = smul.addr %s20, 2
      %s25 = smul.addr %s24, 128
      %s26 = scalar_lea.hbm %s0, %s25
      %s27 = sshll.u32 [#allocation4], 4
      %s28 = int_to_ptr.vmem [resolvable:$true] %s27
      %33 = dma.hbm_to_vmem [thread:$0]  %s26, 1024, %s28, [#allocation5], 256, 256, 16
    $region5: #{tpu_custom_call.1} parent=1 // pred_fallthru
      _
    // Predicated region
    $region6: #{tpu_custom_call.1} parent=1 // pred_check
      _
    $region7: #{tpu_custom_call.1} parent=1 // pred_check_branch
      %35 = sbr.rel (0) target = $region9
    $region8: #{tpu_custom_call.1} parent=1 // pred_region
      %s36 = sadd.s32 0, 0
      %s37 = smul.u32 4, %s36
      %s39 = ssub.s32 1024, 1024
      %40 = vsyncadd [#allocation8], %s39
      %s41 = smul.addr %s37, 2
      %s42 = smul.addr %s41, 128
      %s43 = scalar_lea.hbm %s1, %s42
      %s44 = sshll.u32 [#allocation7], 4
      %s45 = int_to_ptr.vmem [resolvable:$true] %s44
      %50 = dma.hbm_to_vmem [thread:$0]  %s43, 1024, %s45, [#allocation8], 256, 256, 16
    $region9: #{tpu_custom_call.1} parent=1 // pred_fallthru
      _
    // Predicated region
    $region10: #{tpu_custom_call.1} parent=1 // pred_check
      _
    $region11: #{tpu_custom_call.1} parent=1 // pred_check_branch
      %52 = sbr.rel (0) target = $region13
    $region12: #{tpu_custom_call.1} parent=1 // pred_region
      _
    $region13: #{tpu_custom_call.1} parent=1 // pred_fallthru
      _
    // Predicated region
    $region14: #{tpu_custom_call.1} parent=1 // pred_check
      _
    $region15: #{tpu_custom_call.1} parent=1 // pred_check_branch
      %54 = sbr.rel (0) target = $region17
    $region16: #{tpu_custom_call.1} parent=1 // pred_region
      %s55 = sadd.s32 0, 0
      %s56 = smul.u32 4, %s55
      %s58 = ssub.s32 2048, 2048
      %59 = vsyncadd [#allocation8], %s58
      %s60 = smul.addr %s56, 4
      %s61 = smul.addr %s60, 128
      %s62 = scalar_lea.hbm %s3, %s61
      %s63 = sshll.u32 [#allocation9], 4
      %s64 = int_to_ptr.vmem [resolvable:$true] %s63
      %69 = dma.hbm_to_vmem [thread:$0]  %s62, 2048, %s64, [#allocation8], 512, 512, 32
    $region17: #{tpu_custom_call.1} parent=1 // pred_fallthru
      _
    // Predicated region
    $region18: #{tpu_custom_call.1} parent=1 // pred_check
      _
    $region19: #{tpu_custom_call.1} parent=1 // pred_check_branch
      %71 = sbr.rel (0) target = $region21
    $region20: #{tpu_custom_call.1} parent=1 // pred_region
      %s72 = sadd.s32 0, 0
      %s73 = smul.u32 4, %s72
      %s75 = ssub.s32 2048, 2048
      %76 = vsyncadd [#allocation11], %s75
      %s77 = smul.addr %s73, 4
      %s78 = smul.addr %s77, 128
      %s79 = scalar_lea.hbm %s4, %s78
      %s80 = sshll.u32 [#allocation10], 4
      %s81 = int_to_ptr.vmem [resolvable:$true] %s80
      %86 = dma.hbm_to_vmem [thread:$0]  %s79, 2048, %s81, [#allocation11], 512, 512, 32
    $region21: #{tpu_custom_call.1} parent=1 // pred_fallthru
      _
    // Predicated region
    $region22: #{tpu_custom_call.1} parent=1 // pred_check
      _
    $region23: #{tpu_custom_call.1} parent=1 // pred_check_branch
      %88 = sbr.rel (0) target = $region25
    $region24: #{tpu_custom_call.1} parent=1 // pred_region
      %89 = dma.done [#allocation5], 1024
    $region25: #{tpu_custom_call.1} parent=1 // pred_fallthru
      _
    // Predicated region
    $region26: #{tpu_custom_call.1} parent=1 // pred_check
      _
    $region27: #{tpu_custom_call.1} parent=1 // pred_check_branch
      %91 = sbr.rel (0) target = $region29
    $region28: #{tpu_custom_call.1} parent=1 // pred_region
      %92 = dma.done [#allocation8], 1024
    $region29: #{tpu_custom_call.1} parent=1 // pred_fallthru
      _
    // Predicated region
    $region30: #{tpu_custom_call.1} parent=1 // pred_check
      _
    $region31: #{tpu_custom_call.1} parent=1 // pred_check_branch
      %94 = sbr.rel (0) target = $region33
    $region32: #{tpu_custom_call.1} parent=1 // pred_region
      %95 = dma.done [#allocation8], 2048
    $region33: #{tpu_custom_call.1} parent=1 // pred_fallthru
      _
    // Predicated region
    $region34: #{tpu_custom_call.1} parent=1 // pred_check
      _
    $region35: #{tpu_custom_call.1} parent=1 // pred_check_branch
      %97 = sbr.rel (0) target = $region37
    $region36: #{tpu_custom_call.1} parent=1 // pred_region
      %98 = dma.done [#allocation11], 2048
    $region37: #{tpu_custom_call.1} parent=1 // pred_fallthru
      _
    %s99 = sadd.s32 0, 0
    %s100 = smul.u32 4, %s99
    %s101 = sadd.s32 0, 0
    %s102 = smul.u32 4, %s101
    %s103 = sadd.s32 0, 0
    %s104 = smul.u32 4, %s103
    %s105 = sadd.s32 0, 0
    %s106 = smul.u32 4, %s105
    %p107 = scmp.eq.s32.totalorder 0, 0
    // Predicated region
    $region38: #{tpu_custom_call.1} parent=1 // pred_check
      %p108 = pneg %p107
    $region39: #{tpu_custom_call.1} parent=1 // pred_check_branch
      %110 = sbr.rel (%p108) target = $region41
    $region40: #{tpu_custom_call.1} parent=1 // pred_region
      %vm111 = vcmask 0
      %112 = vst.msk [vmem:[#allocation2] sm:$0x1] %vm111, 0.0
      %113 = vst.msk [vmem:[#allocation3] sm:$0x1] %vm111, 0.0
    $region41: #{tpu_custom_call.1} parent=1 // pred_fallthru
      _
    %v114 = vld [vmem:[#allocation4] sm:$0xff]
    %v115 = vld [vmem:[#allocation4 + $0x8] sm:$0xff]
    %v116 = vld [vmem:[#allocation4 + $0x10] sm:$0xff]
    %v117 = vld [vmem:[#allocation4 + $0x18] sm:$0xff]
    %v118 = vld [vmem:[#allocation4 + $0x20] sm:$0xff]
    %v119 = vld [vmem:[#allocation4 + $0x28] sm:$0xff]
    %v120 = vld [vmem:[#allocation4 + $0x30] sm:$0xff]
    %v121 = vld [vmem:[#allocation4 + $0x38] sm:$0xff]
    %v122 = vmul.f32 %v114, 10.0
    %v123 = vmul.f32 %v115, 10.0
    %v124 = vmul.f32 %v116, 10.0
    %v125 = vmul.f32 %v117, 10.0
    %v126 = vmul.f32 %v118, 10.0
    %v127 = vmul.f32 %v119, 10.0
    %v128 = vmul.f32 %v120, 10.0
    %v129 = vmul.f32 %v121, 10.0
    %v130 = vld [vmem:[#allocation7] sm:$0xff]
    %v131 = vld [vmem:[#allocation7 + $0x8] sm:$0xff]
    %v132 = vld [vmem:[#allocation7 + $0x10] sm:$0xff]
    %v133 = vld [vmem:[#allocation7 + $0x18] sm:$0xff]
    %v134 = vld [vmem:[#allocation7 + $0x20] sm:$0xff]
    %v135 = vld [vmem:[#allocation7 + $0x28] sm:$0xff]
    %v136 = vld [vmem:[#allocation7 + $0x30] sm:$0xff]
    %v137 = vld [vmem:[#allocation7 + $0x38] sm:$0xff]
    %v138 = vld [vmem:[%s2] sm:$0x3]
    %v140 = vlaneseq
    %v141 = vshrl.u32 %v140, 7
    %v142 = vsub.s32 0, %v141
    %v143 = vrot.slane %v138, %v142
    %v144 = vlaneseq
    %v145 = vshrl.u32 %v144, 7
    %v146 = vsub.s32 1, %v145
    %v147 = vrot.slane %v138, %v146
    %v150 = vsub.f32 %v130, %v143
    %v151 = vsub.f32 %v131, %v147
    %v152 = vsub.f32 %v132, %v143
    %v153 = vsub.f32 %v133, %v147
    %v154 = vsub.f32 %v134, %v143
    %v155 = vsub.f32 %v135, %v147
    %v156 = vsub.f32 %v136, %v143
    %v157 = vsub.f32 %v137, %v147
    %v158 = vmul.f32 %v150, 14.285714
    %v159 = vmul.f32 %v151, 14.285714
    %v160 = vmul.f32 %v152, 14.285714
    %v161 = vmul.f32 %v153, 14.285714
    %v162 = vmul.f32 %v154, 14.285714
    %v163 = vmul.f32 %v155, 14.285714
    %v164 = vmul.f32 %v156, 14.285714
    %v165 = vmul.f32 %v157, 14.285714
    %v166 = vmax.f32 %v122, %v123
    %167 = vmax.xlane.f32.xlu0 %v166
    %v168 = vpop.xlane.xlu0 %167
    %v169 = vmax.f32 %v124, %v125
    %170 = vmax.xlane.f32.xlu0 %v169
    %v171 = vpop.xlane.xlu0 %170
    %v172 = vmax.f32 %v126, %v127
    %173 = vmax.xlane.f32.xlu0 %v172
    %v174 = vpop.xlane.xlu0 %173
    %v175 = vmax.f32 %v128, %v129
    %176 = vmax.xlane.f32.xlu0 %v175
    %v177 = vpop.xlane.xlu0 %176
    %v178 = vsub.f32 %v122, %v168
    %v179 = vsub.f32 %v123, %v168
    %v180 = vsub.f32 %v124, %v171
    %v181 = vsub.f32 %v125, %v171
    %v182 = vsub.f32 %v126, %v174
    %v183 = vsub.f32 %v127, %v174
    %v184 = vsub.f32 %v128, %v177
    %v185 = vsub.f32 %v129, %v177
    %v186 = vmul.f32 %v178, 1.442695
    %v187 = vpow.pop %v186
    %v188 = vmul.f32 %v179, 1.442695
    %v189 = vpow.pop %v188
    %v190 = vmul.f32 %v180, 1.442695
    %v191 = vpow.pop %v190
    %v192 = vmul.f32 %v181, 1.442695
    %v193 = vpow.pop %v192
    %v194 = vmul.f32 %v182, 1.442695
    %v195 = vpow.pop %v194
    %v196 = vmul.f32 %v183, 1.442695
    %v197 = vpow.pop %v196
    %v198 = vmul.f32 %v184, 1.442695
    %v199 = vpow.pop %v198
    %v200 = vmul.f32 %v185, 1.442695
    %v201 = vpow.pop %v200
    %v202 = vadd.f32 %v187, %v189
    %203 = vadd.xlane.f32.xlu0 %v202
    %v204 = vpop.xlane.xlu0 %203
    %v205 = vadd.f32 %v191, %v193
    %206 = vadd.xlane.f32.xlu0 %v205
    %v207 = vpop.xlane.xlu0 %206
    %v208 = vadd.f32 %v195, %v197
    %209 = vadd.xlane.f32.xlu0 %v208
    %v210 = vpop.xlane.xlu0 %209
    %v211 = vadd.f32 %v199, %v201
    %212 = vadd.xlane.f32.xlu0 %v211
    %v213 = vpop.xlane.xlu0 %212
    %v214 = vlog2.pop %v204
    %v215 = vmul.f32 %v214, 0.6931472
    %v216 = vlog2.pop %v207
    %v217 = vmul.f32 %v216, 0.6931472
    %v218 = vlog2.pop %v210
    %v219 = vmul.f32 %v218, 0.6931472
    %v220 = vlog2.pop %v213
    %v221 = vmul.f32 %v220, 0.6931472
    %v222 = vmax.f32 %v158, %v159
    %223 = vmax.xlane.f32.xlu0 %v222
    %v224 = vpop.xlane.xlu0 %223
    %v225 = vmax.f32 %v160, %v161
    %226 = vmax.xlane.f32.xlu0 %v225
    %v227 = vpop.xlane.xlu0 %226
    %v228 = vmax.f32 %v162, %v163
    %229 = vmax.xlane.f32.xlu0 %v228
    %v230 = vpop.xlane.xlu0 %229
    %v231 = vmax.f32 %v164, %v165
    %232 = vmax.xlane.f32.xlu0 %v231
    %v233 = vpop.xlane.xlu0 %232
    %v234 = vsub.f32 %v158, %v224
    %v235 = vsub.f32 %v159, %v224
    %v236 = vsub.f32 %v160, %v227
    %v237 = vsub.f32 %v161, %v227
    %v238 = vsub.f32 %v162, %v230
    %v239 = vsub.f32 %v163, %v230
    %v240 = vsub.f32 %v164, %v233
    %v241 = vsub.f32 %v165, %v233
    %v242 = vmul.f32 %v234, 1.442695
    %v243 = vpow.pop %v242
    %v244 = vmul.f32 %v235, 1.442695
    %v245 = vpow.pop %v244
    %v246 = vmul.f32 %v236, 1.442695
    %v247 = vpow.pop %v246
    %v248 = vmul.f32 %v237, 1.442695
    %v249 = vpow.pop %v248
    %v250 = vmul.f32 %v238, 1.442695
    %v251 = vpow.pop %v250
    %v252 = vmul.f32 %v239, 1.442695
    %v253 = vpow.pop %v252
    %v254 = vmul.f32 %v240, 1.442695
    %v255 = vpow.pop %v254
    %v256 = vmul.f32 %v241, 1.442695
    %v257 = vpow.pop %v256
    %v258 = vadd.f32 %v243, %v245
    %259 = vadd.xlane.f32.xlu0 %v258
    %v260 = vpop.xlane.xlu0 %259
    %v261 = vadd.f32 %v247, %v249
    %262 = vadd.xlane.f32.xlu0 %v261
    %v263 = vpop.xlane.xlu0 %262
    %v264 = vadd.f32 %v251, %v253
    %265 = vadd.xlane.f32.xlu0 %v264
    %v266 = vpop.xlane.xlu0 %265
    %v267 = vadd.f32 %v255, %v257
    %268 = vadd.xlane.f32.xlu0 %v267
    %v269 = vpop.xlane.xlu0 %268
    %v270 = vmul.f32 %v243, %v178
    %v271 = vmul.f32 %v245, %v179
    %v272 = vmul.f32 %v247, %v180
    %v273 = vmul.f32 %v249, %v181
    %v274 = vmul.f32 %v251, %v182
    %v275 = vmul.f32 %v253, %v183
    %v276 = vmul.f32 %v255, %v184
    %v277 = vmul.f32 %v257, %v185
    %v278 = vadd.f32 %v270, %v271
    %279 = vadd.xlane.f32.xlu0 %v278
    %v280 = vpop.xlane.xlu0 %279
    %v281 = vadd.f32 %v272, %v273
    %282 = vadd.xlane.f32.xlu0 %v281
    %v283 = vpop.xlane.xlu0 %282
    %v284 = vadd.f32 %v274, %v275
    %285 = vadd.xlane.f32.xlu0 %v284
    %v286 = vpop.xlane.xlu0 %285
    %v287 = vadd.f32 %v276, %v277
    %288 = vadd.xlane.f32.xlu0 %v287
    %v289 = vpop.xlane.xlu0 %288
    %v290 = vrcp.pop %v260
    %v291 = vmul.f32 %v280, %v290
    %v292 = vrcp.pop %v263
    %v293 = vmul.f32 %v283, %v292
    %v294 = vrcp.pop %v266
    %v295 = vmul.f32 %v286, %v294
    %v296 = vrcp.pop %v269
    %v297 = vmul.f32 %v289, %v296
    %v298 = vsub.f32 %v215, %v291
    %v299 = vsub.f32 %v217, %v293
    %v300 = vsub.f32 %v219, %v295
    %v301 = vsub.f32 %v221, %v297
    %v302 = vld [vmem:[#allocation2] sm:$0x1]
    %vm303 = vcmask 7168
    %v304 = vsel %vm303, %v298, 0.0
    %v305 = vsel %vm303, %v299, 0.0
    %v306 = vadd.f32 %v304, %v305
    %v307 = vsel %vm303, %v300, 0.0
    %v308 = vadd.f32 %v306, %v307
    %v309 = vsel %vm303, %v301, 0.0
    %v310 = vadd.f32 %v308, %v309
    %311 = vadd.xlane.f32.xlu0 %v310
    %v312 = vpop.xlane.xlu0 %311
    %v313 = vrot.slane %v312, 4
    %v314 = vadd.f32 %v312, %v313
    %v315 = vrot.slane %v314, 2
    %v316 = vadd.f32 %v314, %v315
    %v317 = vrot.slane %v316, 1
    %v318 = vadd.f32 %v316, %v317
    %s319 = vtos %v318
    %v320 = vstv %s319
    %v321 = vadd.f32 %v302, %v320
    %vm322 = vcmask 0
    %323 = vst.msk [vmem:[#allocation2] sm:$0x1] %vm322, %v321
    %v324 = vld [vmem:[#allocation9] sm:$0xff]
    %v325 = vld [vmem:[#allocation9 + $0x8] sm:$0xff]
    %v326 = vld [vmem:[#allocation9 + $0x10] sm:$0xff]
    %v327 = vld [vmem:[#allocation9 + $0x18] sm:$0xff]
    %v328 = vld [vmem:[#allocation9 + $0x20] sm:$0xff]
    %v329 = vld [vmem:[#allocation9 + $0x28] sm:$0xff]
    %v330 = vld [vmem:[#allocation9 + $0x30] sm:$0xff]
    %v331 = vld [vmem:[#allocation9 + $0x38] sm:$0xff]
    %v332 = vld [vmem:[#allocation9 + $0x40] sm:$0xff]
    %v333 = vld [vmem:[#allocation9 + $0x48] sm:$0xff]
    %v334 = vld [vmem:[#allocation9 + $0x50] sm:$0xff]
    %v335 = vld [vmem:[#allocation9 + $0x58] sm:$0xff]
    %v336 = vld [vmem:[#allocation9 + $0x60] sm:$0xff]
    %v337 = vld [vmem:[#allocation9 + $0x68] sm:$0xff]
    %v338 = vld [vmem:[#allocation9 + $0x70] sm:$0xff]
    %v339 = vld [vmem:[#allocation9 + $0x78] sm:$0xff]
    %v340 = vld [vmem:[#allocation10] sm:$0xff]
    %v341 = vld [vmem:[#allocation10 + $0x8] sm:$0xff]
    %v342 = vld [vmem:[#allocation10 + $0x10] sm:$0xff]
    %v343 = vld [vmem:[#allocation10 + $0x18] sm:$0xff]
    %v344 = vld [vmem:[#allocation10 + $0x20] sm:$0xff]
    %v345 = vld [vmem:[#allocation10 + $0x28] sm:$0xff]
    %v346 = vld [vmem:[#allocation10 + $0x30] sm:$0xff]
    %v347 = vld [vmem:[#allocation10 + $0x38] sm:$0xff]
    %v348 = vld [vmem:[#allocation10 + $0x40] sm:$0xff]
    %v349 = vld [vmem:[#allocation10 + $0x48] sm:$0xff]
    %v350 = vld [vmem:[#allocation10 + $0x50] sm:$0xff]
    %v351 = vld [vmem:[#allocation10 + $0x58] sm:$0xff]
    %v352 = vld [vmem:[#allocation10 + $0x60] sm:$0xff]
    %v353 = vld [vmem:[#allocation10 + $0x68] sm:$0xff]
    %v354 = vld [vmem:[#allocation10 + $0x70] sm:$0xff]
    %v355 = vld [vmem:[#allocation10 + $0x78] sm:$0xff]
    %v356 = vsub.f32 %v324, %v340
    %v357 = vsub.f32 %v325, %v341
    %v358 = vsub.f32 %v326, %v342
    %v359 = vsub.f32 %v327, %v343
    %v360 = vsub.f32 %v328, %v344
    %v361 = vsub.f32 %v329, %v345
    %v362 = vsub.f32 %v330, %v346
    %v363 = vsub.f32 %v331, %v347
    %v364 = vsub.f32 %v332, %v348
    %v365 = vsub.f32 %v333, %v349
    %v366 = vsub.f32 %v334, %v350
    %v367 = vsub.f32 %v335, %v351
    %v368 = vsub.f32 %v336, %v352
    %v369 = vsub.f32 %v337, %v353
    %v370 = vsub.f32 %v338, %v354
    %v371 = vsub.f32 %v339, %v355
    %v372 = vld [vmem:[#allocation3] sm:$0x1]
    %v373 = vmul.f32 %v356, %v356
    %v374 = vmul.f32 %v357, %v357
    %v375 = vmul.f32 %v358, %v358
    %v376 = vmul.f32 %v359, %v359
    %v377 = vmul.f32 %v360, %v360
    %v378 = vmul.f32 %v361, %v361
    %v379 = vmul.f32 %v362, %v362
    %v380 = vmul.f32 %v363, %v363
    %v381 = vmul.f32 %v364, %v364
    %v382 = vmul.f32 %v365, %v365
    %v383 = vmul.f32 %v366, %v366
    %v384 = vmul.f32 %v367, %v367
    %v385 = vmul.f32 %v368, %v368
    %v386 = vmul.f32 %v369, %v369
    %v387 = vmul.f32 %v370, %v370
    %v388 = vmul.f32 %v371, %v371
    %v389 = vadd.f32 %v373, %v374
    %v390 = vadd.f32 %v389, %v375
    %v391 = vadd.f32 %v390, %v376
    %v392 = vadd.f32 %v391, %v377
    %v393 = vadd.f32 %v392, %v378
    %v394 = vadd.f32 %v393, %v379
    %v395 = vadd.f32 %v394, %v380
    %v396 = vadd.f32 %v395, %v381
    %v397 = vadd.f32 %v396, %v382
    %v398 = vadd.f32 %v397, %v383
    %v399 = vadd.f32 %v398, %v384
    %v400 = vadd.f32 %v399, %v385
    %v401 = vadd.f32 %v400, %v386
    %v402 = vadd.f32 %v401, %v387
    %v403 = vadd.f32 %v402, %v388
    %404 = vadd.xlane.f32.xlu0 %v403
    %v405 = vpop.xlane.xlu0 %404
    %v406 = vrot.slane %v405, 4
    %v407 = vadd.f32 %v405, %v406
    %v408 = vrot.slane %v407, 2
    %v409 = vadd.f32 %v407, %v408
    %v410 = vrot.slane %v409, 1
    %v411 = vadd.f32 %v409, %v410
    %s412 = vtos %v411
    %v413 = vstv %s412
    %v414 = vadd.f32 %v372, %v413
    %415 = vst.msk [vmem:[#allocation3] sm:$0x1] %vm322, %v414
    // Predicated region
    $region42: #{tpu_custom_call.1} parent=1 // pred_check
      %p416 = pneg %p107
    $region43: #{tpu_custom_call.1} parent=1 // pred_check_branch
      %418 = sbr.rel (%p416) target = $region45
    $region44: #{tpu_custom_call.1} parent=1 // pred_region
      %v419 = vld [vmem:[#allocation2] sm:$0x1]
      %421 = vset.pattern.permute.xlu0 0
      %422 = vperm.xlu0 %421, %v419
      %v423 = vpop.permute.xlu0 %422
      %v425 = vlaneseq
      %v426 = vshrl.u32 %v425, 7
      %v427 = vsub.s32 0, %v426
      %v428 = vrot.slane %v423, %v427
      %429 = vst [vmem:[#allocation12] sm:$0x1] %v428
      %v430 = vld [vmem:[#allocation3] sm:$0x1]
      %432 = vset.pattern.permute.xlu0 0
      %433 = vperm.xlu0 %432, %v430
      %v434 = vpop.permute.xlu0 %433
      %v436 = vlaneseq
      %v437 = vshrl.u32 %v436, 7
      %v438 = vsub.s32 0, %v437
      %v439 = vrot.slane %v434, %v438
      %440 = vst [vmem:[#allocation13] sm:$0x1] %v439
    $region45: #{tpu_custom_call.1} parent=1 // pred_fallthru
      _
    // Predicated region
    $region46: #{tpu_custom_call.1} parent=1 // pred_check
      _
    $region47: #{tpu_custom_call.1} parent=1 // pred_check_branch
      %442 = sbr.rel (0) target = $region49
    $region48: #{tpu_custom_call.1} parent=1 // pred_region
      %s444 = ssub.s32 16, 16
      %445 = vsyncadd [#allocation6], %s444
      %s447 = sshll.u32 [#allocation12], 4
      %s448 = int_to_ptr.vmem [resolvable:$true] %s447
      %450 = dma.vmem_to_hbm [thread:$0]  %s448, 16, %s5, [#allocation6]
    $region49: #{tpu_custom_call.1} parent=1 // pred_fallthru
      _
    // Predicated region
    $region50: #{tpu_custom_call.1} parent=1 // pred_check
      _
    $region51: #{tpu_custom_call.1} parent=1 // pred_check_branch
      %452 = sbr.rel (0) target = $region53
    $region52: #{tpu_custom_call.1} parent=1 // pred_region
      %s454 = ssub.s32 16, 16
      %455 = vsyncadd [#allocation14], %s454
      %s457 = sshll.u32 [#allocation13], 4
      %s458 = int_to_ptr.vmem [resolvable:$true] %s457
      %460 = dma.vmem_to_hbm [thread:$0]  %s458, 16, %s6, [#allocation14]
    $region53: #{tpu_custom_call.1} parent=1 // pred_fallthru
      _
    // Predicated region
    $region54: #{tpu_custom_call.1} parent=1 // pred_check
      _
    $region55: #{tpu_custom_call.1} parent=1 // pred_check_branch
      %462 = sbr.rel (0) target = $region57
    $region56: #{tpu_custom_call.1} parent=1 // pred_region
      %463 = dma.done [#allocation6], 16
    $region57: #{tpu_custom_call.1} parent=1 // pred_fallthru
      _
    // Predicated region
    $region58: #{tpu_custom_call.1} parent=1 // pred_check
      _
    $region59: #{tpu_custom_call.1} parent=1 // pred_check_branch
      %465 = sbr.rel (0) target = $region61
    $region60: #{tpu_custom_call.1} parent=1 // pred_region
      %466 = dma.done [#allocation14], 16
    $region61: #{tpu_custom_call.1} parent=1 // pred_fallthru
      _
    %467 = vsyncpa [#allocation5], 1
    %468 = vsyncpa [#allocation8], 1
    %469 = vsyncpa [#allocation11], 1
    %470 = vsyncpa [#allocation6], 1
    %471 = vsyncpa [#allocation14], 1

</llo_original>
